<compile_context>
chip_gen: v5e
topology: v5e:2x2
jax: 0.10.0
libtpu: 0.0.40
codegen_flags: <defaults>
</compile_context>

<pallas_src>
import functools

import jax
import jax.numpy as jnp
from jax.experimental import pallas as pl
from jax.experimental.pallas import tpu as pltpu


def _cnn_layernorm_kernel(x_ref, gamma_ref, beta_ref, o_ref, *, eps):
    # x_ref: (tile_n, F, tile_t) block; normalize over axis=1 (F on sublanes).
    # gamma_ref / beta_ref: (F, 1) -> broadcast over rows (tile_n) and time (tile_t).
    x = x_ref[...].astype(jnp.float32)                     # (tn, F, tt)
    inv_f = 1.0 / x.shape[1]
    # Fused single sweep: sum(x) and sum(x*x), f32 accumulation.
    s1 = jnp.sum(x, axis=1, keepdims=True)                 # (tn, 1, tt)
    s2 = jnp.sum(x * x, axis=1, keepdims=True)             # (tn, 1, tt)
    mean = s1 * inv_f
    var = jnp.maximum(s2 * inv_f - mean * mean, 0.0)       # biased var, clamped
    inv = jax.lax.rsqrt(var + eps)
    gamma = gamma_ref[...].astype(jnp.float32)             # (F, 1)
    beta = beta_ref[...].astype(jnp.float32)                # (F, 1)
    y = (x - mean) * inv * gamma + beta
    o_ref[...] = y.astype(o_ref.dtype)


def _pick_tiles(n_rows, n_feat, seq_len, itemsize, target_bytes=1 << 20):
    # Lane axis = seq_len: keep it lane-dense (multiple of 128) when possible.
    if seq_len >= 128:
        tile_t = min(1024, (seq_len // 128) * 128)
    else:
        tile_t = seq_len
    # Rows per block sized so each grid step moves ~target_bytes of input.
    block_bytes_per_row = n_feat * tile_t * itemsize
    tile_n = max(1, target_bytes // block_bytes_per_row)
    tile_n = int(min(tile_n, n_rows))
    return tile_n, tile_t


def cnn_layer_norm(x, gamma, beta, *, eps=1e-5):
    """x: (B, C, F, T) -> LayerNorm over F for every (b, c, t). Same shape/dtype."""
    B, C, Fdim, T = x.shape
    N = B * C
    x3 = x.reshape(N, Fdim, T)  # contiguous collapse of leading dims (free)

    itemsize = jnp.dtype(x.dtype).itemsize
    tile_n, tile_t = _pick_tiles(N, Fdim, T, itemsize)

    # Pad instead of asserting divisibility; padded rows/cols are sliced off.
    pad_n = (-N) % tile_n
    pad_t = (-T) % tile_t
    if pad_n or pad_t:
        x3 = jnp.pad(x3, ((0, pad_n), (0, 0), (0, pad_t)))
    Np, Tp = N + pad_n, T + pad_t

    gamma2d = gamma.reshape(Fdim, 1)
    beta2d = beta.reshape(Fdim, 1)

    grid = (Np // tile_n, Tp // tile_t)

    out3 = pl.pallas_call(
        functools.partial(_cnn_layernorm_kernel, eps=eps),
        out_shape=jax.ShapeDtypeStruct((Np, Fdim, Tp), x.dtype),
        grid=grid,
        in_specs=[
            pl.BlockSpec((tile_n, Fdim, tile_t), lambda i, j: (i, 0, j)),
            pl.BlockSpec((Fdim, 1), lambda i, j: (0, 0)),
            pl.BlockSpec((Fdim, 1), lambda i, j: (0, 0)),
        ],
        out_specs=pl.BlockSpec((tile_n, Fdim, tile_t), lambda i, j: (i, 0, j)),
        compiler_params=pltpu.CompilerParams(
            dimension_semantics=("parallel", "parallel"),
            vmem_limit_bytes=32 * 1024 * 1024,
        ),
    )(x3, gamma2d, beta2d)

    if pad_n or pad_t:
        out3 = out3[:N, :, :T]
    return out3.reshape(B, C, Fdim, T)


def _reference(x, gamma, beta, eps=1e-5):
    # pure-JAX reference of the PyTorch forward
    xt = jnp.swapaxes(x, 2, 3)
    mean = jnp.mean(xt, axis=-1, keepdims=True)
    var = jnp.mean((xt - mean) ** 2, axis=-1, keepdims=True)
    y = (xt - mean) / jnp.sqrt(var + eps) * gamma + beta
    return jnp.swapaxes(y, 2, 3)


if __name__ == "__main__":
    key = jax.random.PRNGKey(0)

    # Shapes implied by the module: (batch, channels, features, seq_len)
    B, C, Fdim, T = 2, 4, 32, 8
    x = jax.random.normal(key, (B, C, Fdim, T), dtype=jnp.float32)
    # nn.LayerNorm default init: weight = ones, bias = zeros (deterministic)
    gamma = jnp.ones((Fdim,), dtype=jnp.float32)
    beta = jnp.zeros((Fdim,), dtype=jnp.float32)

    out = jax.block_until_ready(cnn_layer_norm(x, gamma, beta))
    ref = _reference(x, gamma, beta)
    assert out.shape == x.shape and out.dtype == x.dtype
    assert jnp.allclose(out, ref, atol=1e-5, rtol=1e-5), "mismatch vs reference"

    # Extra check: non-divisible seq_len exercises padding + multi-tile grid.
    x2 = jax.random.normal(jax.random.PRNGKey(1), (2, 3, 64, 200), dtype=jnp.float32)
    g2 = jax.random.normal(jax.random.PRNGKey(2), (64,), dtype=jnp.float32)
    b2 = jax.random.normal(jax.random.PRNGKey(3), (64,), dtype=jnp.float32)
    out2 = jax.block_until_ready(cnn_layer_norm(x2, g2, b2))
    ref2 = _reference(x2, g2, b2)
    assert jnp.allclose(out2, ref2, atol=1e-4, rtol=1e-4), "mismatch (padded path)"

    print("KERNEL_OK")
</pallas_src>

<mosaic_0001>
module attributes {stable_mosaic.version = 11 : i64} {
  func.func @_cnn_layernorm_kernel(%arg0: i32, %arg1: i32, %arg2: memref<8x32x8xf32, #tpu.memory_space<vmem>>, %arg3: memref<32x1xf32, #tpu.memory_space<vmem>>, %arg4: memref<32x1xf32, #tpu.memory_space<vmem>>, %arg5: memref<8x32x8xf32, #tpu.memory_space<vmem>>) attributes {dimension_semantics = [#tpu.dimension_semantics<parallel>, #tpu.dimension_semantics<parallel>], iteration_bounds = array<i64: 1, 1>, scalar_prefetch = 0 : i64, scratch_operands = 0 : i64, tpu.core_type = #tpu.core_type<tc>, window_params = [{transform_indices = @transform_0, window_bounds = array<i64: 8, 32, 8>}, {pipeline_mode = #tpu.pipeline_mode<synchronous>, transform_indices = @transform_1, window_bounds = array<i64: 32, 1>}, {pipeline_mode = #tpu.pipeline_mode<synchronous>, transform_indices = @transform_2, window_bounds = array<i64: 32, 1>}, {transform_indices = @transform_3, window_bounds = array<i64: 8, 32, 8>}]} {
    %c0 = arith.constant 0 : index
    %c0_0 = arith.constant 0 : index
    %c0_1 = arith.constant 0 : index
    %0 = vector.load %arg2[%c0, %c0_0, %c0_1] : memref<8x32x8xf32, #tpu.memory_space<vmem>>, vector<8x32x8xf32>
    %cst = arith.constant dense<0.000000e+00> : vector<8x8xf32>
    %1 = vector.multi_reduction <add>, %0, %cst [1] : vector<8x32x8xf32> to vector<8x8xf32>
    %2 = vector.shape_cast %1 : vector<8x8xf32> to vector<8x1x8xf32>
    %3 = arith.mulf %0, %0 : vector<8x32x8xf32>
    %cst_2 = arith.constant dense<0.000000e+00> : vector<8x8xf32>
    %4 = vector.multi_reduction <add>, %3, %cst_2 [1] : vector<8x32x8xf32> to vector<8x8xf32>
    %5 = vector.shape_cast %4 : vector<8x8xf32> to vector<8x1x8xf32>
    %cst_3 = arith.constant 3.125000e-02 : f32
    %6 = vector.broadcast %cst_3 : f32 to vector<8x1x8xf32>
    %7 = arith.mulf %2, %6 : vector<8x1x8xf32>
    %cst_4 = arith.constant 3.125000e-02 : f32
    %8 = vector.broadcast %cst_4 : f32 to vector<8x1x8xf32>
    %9 = arith.mulf %5, %8 : vector<8x1x8xf32>
    %10 = arith.mulf %7, %7 : vector<8x1x8xf32>
    %11 = arith.subf %9, %10 : vector<8x1x8xf32>
    %cst_5 = arith.constant 0.000000e+00 : f32
    %12 = vector.broadcast %cst_5 : f32 to vector<8x1x8xf32>
    %13 = arith.maximumf %11, %12 : vector<8x1x8xf32>
    %cst_6 = arith.constant 9.99999974E-6 : f32
    %14 = vector.broadcast %cst_6 : f32 to vector<8x1x8xf32>
    %15 = arith.addf %13, %14 : vector<8x1x8xf32>
    %16 = math.rsqrt %15 : vector<8x1x8xf32>
    %c0_7 = arith.constant 0 : index
    %c0_8 = arith.constant 0 : index
    %17 = vector.load %arg3[%c0_7, %c0_8] : memref<32x1xf32, #tpu.memory_space<vmem>>, vector<32x1xf32>
    %c0_9 = arith.constant 0 : index
    %c0_10 = arith.constant 0 : index
    %18 = vector.load %arg4[%c0_9, %c0_10] : memref<32x1xf32, #tpu.memory_space<vmem>>, vector<32x1xf32>
    %19 = vector.broadcast %7 : vector<8x1x8xf32> to vector<8x32x8xf32>
    %20 = arith.subf %0, %19 : vector<8x32x8xf32>
    %21 = vector.broadcast %16 : vector<8x1x8xf32> to vector<8x32x8xf32>
    %22 = arith.mulf %20, %21 : vector<8x32x8xf32>
    %23 = vector.shape_cast %17 : vector<32x1xf32> to vector<1x32x1xf32>
    %24 = vector.broadcast %23 : vector<1x32x1xf32> to vector<8x32x8xf32>
    %25 = arith.mulf %22, %24 : vector<8x32x8xf32>
    %26 = vector.shape_cast %18 : vector<32x1xf32> to vector<1x32x1xf32>
    %27 = vector.broadcast %26 : vector<1x32x1xf32> to vector<8x32x8xf32>
    %28 = arith.addf %25, %27 : vector<8x32x8xf32>
    %c0_11 = arith.constant 0 : index
    %c0_12 = arith.constant 0 : index
    %c0_13 = arith.constant 0 : index
    %29 = vector.load %arg5[%c0_11, %c0_12, %c0_13] : memref<8x32x8xf32, #tpu.memory_space<vmem>>, vector<8x32x8xf32>
    tpu.vector_store %arg5[%c0_11, %c0_12, %c0_13], %28 {strides = array<i32>} : memref<8x32x8xf32, #tpu.memory_space<vmem>>, vector<8x32x8xf32>,
    return
  }
  func.func @transform_0(%arg0: i32, %arg1: i32) -> (i32, i32, i32) {
    %c0_i32 = arith.constant 0 : i32
    %c0_i32_0 = arith.constant 0 : i32
    return %arg0, %c0_i32, %arg1 : i32, i32, i32
  }
  func.func @transform_1(%arg0: i32, %arg1: i32) -> (i32, i32) {
    %c0_i32 = arith.constant 0 : i32
    %c0_i32_0 = arith.constant 0 : i32
    %c0_i32_1 = arith.constant 0 : i32
    return %c0_i32, %c0_i32_0 : i32, i32
  }
  func.func @transform_2(%arg0: i32, %arg1: i32) -> (i32, i32) {
    %c0_i32 = arith.constant 0 : i32
    %c0_i32_0 = arith.constant 0 : i32
    %c0_i32_1 = arith.constant 0 : i32
    return %c0_i32, %c0_i32_0 : i32, i32
  }
  func.func @transform_3(%arg0: i32, %arg1: i32) -> (i32, i32, i32) {
    %c0_i32 = arith.constant 0 : i32
    %c0_i32_0 = arith.constant 0 : i32
    return %arg0, %c0_i32, %arg1 : i32, i32, i32
  }
}

</mosaic_0001>

<llo_original>
// kernel: tpu_custom_call.1
$region0: #{tpu_custom_call.1}
  #allocation0 [shape = 'u32[]', space=smem, size = 0x4, offset = 0x4, fixed_abs, tag = 'smem constant byte address 0x4 - core index']
  #allocation1 [shape = 'u32[72,128]{1,0:T(1,128)}', space=vmem, size = 0x9000, scoped, tag = 'internal scratch']
  %s0 = inlined_call_operand.vmem [shape: f32[8,32,8], index: 0, kind: input, shape index: {}]
  %s1 = inlined_call_operand.vmem [shape: f32[32,1], index: 1, kind: input, shape index: {}]
  %s2 = inlined_call_operand.vmem [shape: f32[32,1], index: 2, kind: input, shape index: {}]
  %s3 = inlined_call_operand.vmem [shape: f32[8,32,8], index: 3, kind: output, shape index: {}]
  %s4 = sld [smem:[#allocation0]]
  $region22: #{tpu_custom_call.1} parent=0
    _
  %s6 = ssub.s32 1, %s4
  %s7 = scalar_select 0, %s6, %s4
  // Predicated region
  $region2: #{tpu_custom_call.1} parent=0 // pred_check
    _
  $region3: #{tpu_custom_call.1} parent=0 // pred_check_branch
    %9 = sbr.rel (0) target = $region5
  $region4: #{tpu_custom_call.1} parent=0 // pred_region
    _
  $region5: #{tpu_custom_call.1} parent=0 // pred_fallthru
    _
  // Predicated region
  $region6: #{tpu_custom_call.1} parent=0 // pred_check
    _
  $region7: #{tpu_custom_call.1} parent=0 // pred_check_branch
    %11 = sbr.rel (0) target = $region9
  $region8: #{tpu_custom_call.1} parent=0 // pred_region
    _
  $region9: #{tpu_custom_call.1} parent=0 // pred_fallthru
    _
  // Predicated region
  $region10: #{tpu_custom_call.1} parent=0 // pred_check
    _
  $region11: #{tpu_custom_call.1} parent=0 // pred_check_branch
    %13 = sbr.rel (0) target = $region13
  $region12: #{tpu_custom_call.1} parent=0 // pred_region
    _
  $region13: #{tpu_custom_call.1} parent=0 // pred_fallthru
    _
  %v14 = vld [vmem:[%s0] sm:$0xff]
  %v15 = vld [vmem:[%s0 + $0x8] sm:$0xff]
  %v16 = vld [vmem:[%s0 + $0x10] sm:$0xff]
  %v17 = vld [vmem:[%s0 + $0x18] sm:$0xff]
  %v18 = vld [vmem:[%s0 + $0x20] sm:$0xff]
  %v19 = vld [vmem:[%s0 + $0x28] sm:$0xff]
  %v20 = vld [vmem:[%s0 + $0x30] sm:$0xff]
  %v21 = vld [vmem:[%s0 + $0x38] sm:$0xff]
  %v22 = vld [vmem:[%s0 + $0x40] sm:$0xff]
  %v23 = vld [vmem:[%s0 + $0x48] sm:$0xff]
  %v24 = vld [vmem:[%s0 + $0x50] sm:$0xff]
  %v25 = vld [vmem:[%s0 + $0x58] sm:$0xff]
  %v26 = vld [vmem:[%s0 + $0x60] sm:$0xff]
  %v27 = vld [vmem:[%s0 + $0x68] sm:$0xff]
  %v28 = vld [vmem:[%s0 + $0x70] sm:$0xff]
  %v29 = vld [vmem:[%s0 + $0x78] sm:$0xff]
  %v30 = vld [vmem:[%s0 + $0x80] sm:$0xff]
  %v31 = vld [vmem:[%s0 + $0x88] sm:$0xff]
  %v32 = vld [vmem:[%s0 + $0x90] sm:$0xff]
  %v33 = vld [vmem:[%s0 + $0x98] sm:$0xff]
  %v34 = vld [vmem:[%s0 + $0xa0] sm:$0xff]
  %v35 = vld [vmem:[%s0 + $0xa8] sm:$0xff]
  %v36 = vld [vmem:[%s0 + $0xb0] sm:$0xff]
  %v37 = vld [vmem:[%s0 + $0xb8] sm:$0xff]
  %v38 = vld [vmem:[%s0 + $0xc0] sm:$0xff]
  %v39 = vld [vmem:[%s0 + $0xc8] sm:$0xff]
  %v40 = vld [vmem:[%s0 + $0xd0] sm:$0xff]
  %v41 = vld [vmem:[%s0 + $0xd8] sm:$0xff]
  %v42 = vld [vmem:[%s0 + $0xe0] sm:$0xff]
  %v43 = vld [vmem:[%s0 + $0xe8] sm:$0xff]
  %v44 = vld [vmem:[%s0 + $0xf0] sm:$0xff]
  %v45 = vld [vmem:[%s0 + $0xf8] sm:$0xff]
  %vm46 = vcmask 64512
  %v47 = vsel %vm46, %v14, 0.0
  %v48 = vsel %vm46, %v15, 0.0
  %v49 = vadd.f32 %v47, %v48
  %v50 = vsel %vm46, %v16, 0.0
  %v51 = vadd.f32 %v49, %v50
  %v52 = vsel %vm46, %v17, 0.0
  %v53 = vadd.f32 %v51, %v52
  %v54 = vrot.slane %v53, 4
  %v55 = vadd.f32 %v53, %v54
  %v56 = vrot.slane %v55, 2
  %v57 = vadd.f32 %v55, %v56
  %v58 = vrot.slane %v57, 1
  %v59 = vadd.f32 %v57, %v58
  %v60 = vsel %vm46, %v18, 0.0
  %v61 = vsel %vm46, %v19, 0.0
  %v62 = vadd.f32 %v60, %v61
  %v63 = vsel %vm46, %v20, 0.0
  %v64 = vadd.f32 %v62, %v63
  %v65 = vsel %vm46, %v21, 0.0
  %v66 = vadd.f32 %v64, %v65
  %v67 = vrot.slane %v66, 4
  %v68 = vadd.f32 %v66, %v67
  %v69 = vrot.slane %v68, 2
  %v70 = vadd.f32 %v68, %v69
  %v71 = vrot.slane %v70, 1
  %v72 = vadd.f32 %v70, %v71
  %v73 = vsel %vm46, %v22, 0.0
  %v74 = vsel %vm46, %v23, 0.0
  %v75 = vadd.f32 %v73, %v74
  %v76 = vsel %vm46, %v24, 0.0
  %v77 = vadd.f32 %v75, %v76
  %v78 = vsel %vm46, %v25, 0.0
  %v79 = vadd.f32 %v77, %v78
  %v80 = vrot.slane %v79, 4
  %v81 = vadd.f32 %v79, %v80
  %v82 = vrot.slane %v81, 2
  %v83 = vadd.f32 %v81, %v82
  %v84 = vrot.slane %v83, 1
  %v85 = vadd.f32 %v83, %v84
  %v86 = vsel %vm46, %v26, 0.0
  %v87 = vsel %vm46, %v27, 0.0
  %v88 = vadd.f32 %v86, %v87
  %v89 = vsel %vm46, %v28, 0.0
  %v90 = vadd.f32 %v88, %v89
  %v91 = vsel %vm46, %v29, 0.0
  %v92 = vadd.f32 %v90, %v91
  %v93 = vrot.slane %v92, 4
  %v94 = vadd.f32 %v92, %v93
  %v95 = vrot.slane %v94, 2
  %v96 = vadd.f32 %v94, %v95
  %v97 = vrot.slane %v96, 1
  %v98 = vadd.f32 %v96, %v97
  %v99 = vsel %vm46, %v30, 0.0
  %v100 = vsel %vm46, %v31, 0.0
  %v101 = vadd.f32 %v99, %v100
  %v102 = vsel %vm46, %v32, 0.0
  %v103 = vadd.f32 %v101, %v102
  %v104 = vsel %vm46, %v33, 0.0
  %v105 = vadd.f32 %v103, %v104
  %v106 = vrot.slane %v105, 4
  %v107 = vadd.f32 %v105, %v106
  %v108 = vrot.slane %v107, 2
  %v109 = vadd.f32 %v107, %v108
  %v110 = vrot.slane %v109, 1
  %v111 = vadd.f32 %v109, %v110
  %v112 = vsel %vm46, %v34, 0.0
  %v113 = vsel %vm46, %v35, 0.0
  %v114 = vadd.f32 %v112, %v113
  %v115 = vsel %vm46, %v36, 0.0
  %v116 = vadd.f32 %v114, %v115
  %v117 = vsel %vm46, %v37, 0.0
  %v118 = vadd.f32 %v116, %v117
  %v119 = vrot.slane %v118, 4
  %v120 = vadd.f32 %v118, %v119
  %v121 = vrot.slane %v120, 2
  %v122 = vadd.f32 %v120, %v121
  %v123 = vrot.slane %v122, 1
  %v124 = vadd.f32 %v122, %v123
  %v125 = vsel %vm46, %v38, 0.0
  %v126 = vsel %vm46, %v39, 0.0
  %v127 = vadd.f32 %v125, %v126
  %v128 = vsel %vm46, %v40, 0.0
  %v129 = vadd.f32 %v127, %v128
  %v130 = vsel %vm46, %v41, 0.0
  %v131 = vadd.f32 %v129, %v130
  %v132 = vrot.slane %v131, 4
  %v133 = vadd.f32 %v131, %v132
  %v134 = vrot.slane %v133, 2
  %v135 = vadd.f32 %v133, %v134
  %v136 = vrot.slane %v135, 1
  %v137 = vadd.f32 %v135, %v136
  %v138 = vsel %vm46, %v42, 0.0
  %v139 = vsel %vm46, %v43, 0.0
  %v140 = vadd.f32 %v138, %v139
  %v141 = vsel %vm46, %v44, 0.0
  %v142 = vadd.f32 %v140, %v141
  %v143 = vsel %vm46, %v45, 0.0
  %v144 = vadd.f32 %v142, %v143
  %v145 = vrot.slane %v144, 4
  %v146 = vadd.f32 %v144, %v145
  %v147 = vrot.slane %v146, 2
  %v148 = vadd.f32 %v146, %v147
  %v149 = vrot.slane %v148, 1
  %v150 = vadd.f32 %v148, %v149
  %v151 = vmul.f32 %v14, %v14
  %v152 = vmul.f32 %v15, %v15
  %v153 = vmul.f32 %v16, %v16
  %v154 = vmul.f32 %v17, %v17
  %v155 = vmul.f32 %v18, %v18
  %v156 = vmul.f32 %v19, %v19
  %v157 = vmul.f32 %v20, %v20
  %v158 = vmul.f32 %v21, %v21
  %v159 = vmul.f32 %v22, %v22
  %v160 = vmul.f32 %v23, %v23
  %v161 = vmul.f32 %v24, %v24
  %v162 = vmul.f32 %v25, %v25
  %v163 = vmul.f32 %v26, %v26
  %v164 = vmul.f32 %v27, %v27
  %v165 = vmul.f32 %v28, %v28
  %v166 = vmul.f32 %v29, %v29
  %v167 = vmul.f32 %v30, %v30
  %v168 = vmul.f32 %v31, %v31
  %v169 = vmul.f32 %v32, %v32
  %v170 = vmul.f32 %v33, %v33
  %v171 = vmul.f32 %v34, %v34
  %v172 = vmul.f32 %v35, %v35
  %v173 = vmul.f32 %v36, %v36
  %v174 = vmul.f32 %v37, %v37
  %v175 = vmul.f32 %v38, %v38
  %v176 = vmul.f32 %v39, %v39
  %v177 = vmul.f32 %v40, %v40
  %v178 = vmul.f32 %v41, %v41
  %v179 = vmul.f32 %v42, %v42
  %v180 = vmul.f32 %v43, %v43
  %v181 = vmul.f32 %v44, %v44
  %v182 = vmul.f32 %v45, %v45
  %v183 = vsel %vm46, %v151, 0.0
  %v184 = vsel %vm46, %v152, 0.0
  %v185 = vadd.f32 %v183, %v184
  %v186 = vsel %vm46, %v153, 0.0
  %v187 = vadd.f32 %v185, %v186
  %v188 = vsel %vm46, %v154, 0.0
  %v189 = vadd.f32 %v187, %v188
  %v190 = vrot.slane %v189, 4
  %v191 = vadd.f32 %v189, %v190
  %v192 = vrot.slane %v191, 2
  %v193 = vadd.f32 %v191, %v192
  %v194 = vrot.slane %v193, 1
  %v195 = vadd.f32 %v193, %v194
  %v196 = vsel %vm46, %v155, 0.0
  %v197 = vsel %vm46, %v156, 0.0
  %v198 = vadd.f32 %v196, %v197
  %v199 = vsel %vm46, %v157, 0.0
  %v200 = vadd.f32 %v198, %v199
  %v201 = vsel %vm46, %v158, 0.0
  %v202 = vadd.f32 %v200, %v201
  %v203 = vrot.slane %v202, 4
  %v204 = vadd.f32 %v202, %v203
  %v205 = vrot.slane %v204, 2
  %v206 = vadd.f32 %v204, %v205
  %v207 = vrot.slane %v206, 1
  %v208 = vadd.f32 %v206, %v207
  %v209 = vsel %vm46, %v159, 0.0
  %v210 = vsel %vm46, %v160, 0.0
  %v211 = vadd.f32 %v209, %v210
  %v212 = vsel %vm46, %v161, 0.0
  %v213 = vadd.f32 %v211, %v212
  %v214 = vsel %vm46, %v162, 0.0
  %v215 = vadd.f32 %v213, %v214
  %v216 = vrot.slane %v215, 4
  %v217 = vadd.f32 %v215, %v216
  %v218 = vrot.slane %v217, 2
  %v219 = vadd.f32 %v217, %v218
  %v220 = vrot.slane %v219, 1
  %v221 = vadd.f32 %v219, %v220
  %v222 = vsel %vm46, %v163, 0.0
  %v223 = vsel %vm46, %v164, 0.0
  %v224 = vadd.f32 %v222, %v223
  %v225 = vsel %vm46, %v165, 0.0
  %v226 = vadd.f32 %v224, %v225
  %v227 = vsel %vm46, %v166, 0.0
  %v228 = vadd.f32 %v226, %v227
  %v229 = vrot.slane %v228, 4
  %v230 = vadd.f32 %v228, %v229
  %v231 = vrot.slane %v230, 2
  %v232 = vadd.f32 %v230, %v231
  %v233 = vrot.slane %v232, 1
  %v234 = vadd.f32 %v232, %v233
  %v235 = vsel %vm46, %v167, 0.0
  %v236 = vsel %vm46, %v168, 0.0
  %v237 = vadd.f32 %v235, %v236
  %v238 = vsel %vm46, %v169, 0.0
  %v239 = vadd.f32 %v237, %v238
  %v240 = vsel %vm46, %v170, 0.0
  %v241 = vadd.f32 %v239, %v240
  %v242 = vrot.slane %v241, 4
  %v243 = vadd.f32 %v241, %v242
  %v244 = vrot.slane %v243, 2
  %v245 = vadd.f32 %v243, %v244
  %v246 = vrot.slane %v245, 1
  %v247 = vadd.f32 %v245, %v246
  %v248 = vsel %vm46, %v171, 0.0
  %v249 = vsel %vm46, %v172, 0.0
  %v250 = vadd.f32 %v248, %v249
  %v251 = vsel %vm46, %v173, 0.0
  %v252 = vadd.f32 %v250, %v251
  %v253 = vsel %vm46, %v174, 0.0
  %v254 = vadd.f32 %v252, %v253
  %v255 = vrot.slane %v254, 4
  %v256 = vadd.f32 %v254, %v255
  %v257 = vrot.slane %v256, 2
  %v258 = vadd.f32 %v256, %v257
  %v259 = vrot.slane %v258, 1
  %v260 = vadd.f32 %v258, %v259
  %v261 = vsel %vm46, %v175, 0.0
  %v262 = vsel %vm46, %v176, 0.0
  %v263 = vadd.f32 %v261, %v262
  %v264 = vsel %vm46, %v177, 0.0
  %v265 = vadd.f32 %v263, %v264
  %v266 = vsel %vm46, %v178, 0.0
  %v267 = vadd.f32 %v265, %v266
  %v268 = vrot.slane %v267, 4
  %v269 = vadd.f32 %v267, %v268
  %v270 = vrot.slane %v269, 2
  %v271 = vadd.f32 %v269, %v270
  %v272 = vrot.slane %v271, 1
  %v273 = vadd.f32 %v271, %v272
  %v274 = vsel %vm46, %v179, 0.0
  %v275 = vsel %vm46, %v180, 0.0
  %v276 = vadd.f32 %v274, %v275
  %v277 = vsel %vm46, %v181, 0.0
  %v278 = vadd.f32 %v276, %v277
  %v279 = vsel %vm46, %v182, 0.0
  %v280 = vadd.f32 %v278, %v279
  %v281 = vrot.slane %v280, 4
  %v282 = vadd.f32 %v280, %v281
  %v283 = vrot.slane %v282, 2
  %v284 = vadd.f32 %v282, %v283
  %v285 = vrot.slane %v284, 1
  %v286 = vadd.f32 %v284, %v285
  %v287 = vmul.f32 %v59, 0.03125
  %v288 = vmul.f32 %v72, 0.03125
  %v289 = vmul.f32 %v85, 0.03125
  %v290 = vmul.f32 %v98, 0.03125
  %v291 = vmul.f32 %v111, 0.03125
  %v292 = vmul.f32 %v124, 0.03125
  %v293 = vmul.f32 %v137, 0.03125
  %v294 = vmul.f32 %v150, 0.03125
  %v295 = vmul.f32 %v195, 0.03125
  %v296 = vmul.f32 %v208, 0.03125
  %v297 = vmul.f32 %v221, 0.03125
  %v298 = vmul.f32 %v234, 0.03125
  %v299 = vmul.f32 %v247, 0.03125
  %v300 = vmul.f32 %v260, 0.03125
  %v301 = vmul.f32 %v273, 0.03125
  %v302 = vmul.f32 %v286, 0.03125
  %v303 = vmul.f32 %v287, %v287
  %v304 = vmul.f32 %v288, %v288
  %v305 = vmul.f32 %v289, %v289
  %v306 = vmul.f32 %v290, %v290
  %v307 = vmul.f32 %v291, %v291
  %v308 = vmul.f32 %v292, %v292
  %v309 = vmul.f32 %v293, %v293
  %v310 = vmul.f32 %v294, %v294
  %v311 = vsub.f32 %v295, %v303
  %v312 = vsub.f32 %v296, %v304
  %v313 = vsub.f32 %v297, %v305
  %v314 = vsub.f32 %v298, %v306
  %v315 = vsub.f32 %v299, %v307
  %v316 = vsub.f32 %v300, %v308
  %v317 = vsub.f32 %v301, %v309
  %v318 = vsub.f32 %v302, %v310
  %v319 = vmax.f32 %v311, 0.0
  %v320 = vmax.f32 %v312, 0.0
  %v321 = vmax.f32 %v313, 0.0
  %v322 = vmax.f32 %v314, 0.0
  %v323 = vmax.f32 %v315, 0.0
  %v324 = vmax.f32 %v316, 0.0
  %v325 = vmax.f32 %v317, 0.0
  %v326 = vmax.f32 %v318, 0.0
  %v327 = vadd.f32 %v319, 1e-05
  %v328 = vadd.f32 %v320, 1e-05
  %v329 = vadd.f32 %v321, 1e-05
  %v330 = vadd.f32 %v322, 1e-05
  %v331 = vadd.f32 %v323, 1e-05
  %v332 = vadd.f32 %v324, 1e-05
  %v333 = vadd.f32 %v325, 1e-05
  %v334 = vadd.f32 %v326, 1e-05
  %v335 = vrsqrt.pop %v327
  %v336 = vmul.f32 %v335, %v327
  %v337 = vmul.f32 %v336, %v335
  %v338 = vmul.f32 0.5, %v337
  %v339 = vsub.f32 1.5, %v338
  %v340 = vmul.f32 %v335, %v339
  %vm341 = vweird.f32 %v327
  %vm342 = vweird.f32 %v335
  %vm343 = vmor %vm341, %vm342
  %v344 = vsel %vm343, %v335, %v340
  %v345 = vrsqrt.pop %v328
  %v346 = vmul.f32 %v345, %v328
  %v347 = vmul.f32 %v346, %v345
  %v348 = vmul.f32 0.5, %v347
  %v349 = vsub.f32 1.5, %v348
  %v350 = vmul.f32 %v345, %v349
  %vm351 = vweird.f32 %v328
  %vm352 = vweird.f32 %v345
  %vm353 = vmor %vm351, %vm352
  %v354 = vsel %vm353, %v345, %v350
  %v355 = vrsqrt.pop %v329
  %v356 = vmul.f32 %v355, %v329
  %v357 = vmul.f32 %v356, %v355
  %v358 = vmul.f32 0.5, %v357
  %v359 = vsub.f32 1.5, %v358
  %v360 = vmul.f32 %v355, %v359
  %vm361 = vweird.f32 %v329
  %vm362 = vweird.f32 %v355
  %vm363 = vmor %vm361, %vm362
  %v364 = vsel %vm363, %v355, %v360
  %v365 = vrsqrt.pop %v330
  %v366 = vmul.f32 %v365, %v330
  %v367 = vmul.f32 %v366, %v365
  %v368 = vmul.f32 0.5, %v367
  %v369 = vsub.f32 1.5, %v368
  %v370 = vmul.f32 %v365, %v369
  %vm371 = vweird.f32 %v330
  %vm372 = vweird.f32 %v365
  %vm373 = vmor %vm371, %vm372
  %v374 = vsel %vm373, %v365, %v370
  %v375 = vrsqrt.pop %v331
  %v376 = vmul.f32 %v375, %v331
  %v377 = vmul.f32 %v376, %v375
  %v378 = vmul.f32 0.5, %v377
  %v379 = vsub.f32 1.5, %v378
  %v380 = vmul.f32 %v375, %v379
  %vm381 = vweird.f32 %v331
  %vm382 = vweird.f32 %v375
  %vm383 = vmor %vm381, %vm382
  %v384 = vsel %vm383, %v375, %v380
  %v385 = vrsqrt.pop %v332
  %v386 = vmul.f32 %v385, %v332
  %v387 = vmul.f32 %v386, %v385
  %v388 = vmul.f32 0.5, %v387
  %v389 = vsub.f32 1.5, %v388
  %v390 = vmul.f32 %v385, %v389
  %vm391 = vweird.f32 %v332
  %vm392 = vweird.f32 %v385
  %vm393 = vmor %vm391, %vm392
  %v394 = vsel %vm393, %v385, %v390
  %v395 = vrsqrt.pop %v333
  %v396 = vmul.f32 %v395, %v333
  %v397 = vmul.f32 %v396, %v395
  %v398 = vmul.f32 0.5, %v397
  %v399 = vsub.f32 1.5, %v398
  %v400 = vmul.f32 %v395, %v399
  %vm401 = vweird.f32 %v333
  %vm402 = vweird.f32 %v395
  %vm403 = vmor %vm401, %vm402
  %v404 = vsel %vm403, %v395, %v400
  %v405 = vrsqrt.pop %v334
  %v406 = vmul.f32 %v405, %v334
  %v407 = vmul.f32 %v406, %v405
  %v408 = vmul.f32 0.5, %v407
  %v409 = vsub.f32 1.5, %v408
  %v410 = vmul.f32 %v405, %v409
  %vm411 = vweird.f32 %v334
  %vm412 = vweird.f32 %v405
  %vm413 = vmor %vm411, %vm412
  %v414 = vsel %vm413, %v405, %v410
  %v415 = vld [vmem:[%s1] sm:$0xff]
  %v416 = vld [vmem:[%s1 + $0x8] sm:$0xff]
  %v417 = vld [vmem:[%s1 + $0x10] sm:$0xff]
  %v418 = vld [vmem:[%s1 + $0x18] sm:$0xff]
  %v419 = vld [vmem:[%s2] sm:$0xff]
  %v420 = vld [vmem:[%s2 + $0x8] sm:$0xff]
  %v421 = vld [vmem:[%s2 + $0x10] sm:$0xff]
  %v422 = vld [vmem:[%s2 + $0x18] sm:$0xff]
  %v423 = vsub.f32 %v14, %v287
  %v424 = vsub.f32 %v15, %v287
  %v425 = vsub.f32 %v16, %v287
  %v426 = vsub.f32 %v17, %v287
  %v427 = vsub.f32 %v18, %v288
  %v428 = vsub.f32 %v19, %v288
  %v429 = vsub.f32 %v20, %v288
  %v430 = vsub.f32 %v21, %v288
  %v431 = vsub.f32 %v22, %v289
  %v432 = vsub.f32 %v23, %v289
  %v433 = vsub.f32 %v24, %v289
  %v434 = vsub.f32 %v25, %v289
  %v435 = vsub.f32 %v26, %v290
  %v436 = vsub.f32 %v27, %v290
  %v437 = vsub.f32 %v28, %v290
  %v438 = vsub.f32 %v29, %v290
  %v439 = vsub.f32 %v30, %v291
  %v440 = vsub.f32 %v31, %v291
  %v441 = vsub.f32 %v32, %v291
  %v442 = vsub.f32 %v33, %v291
  %v443 = vsub.f32 %v34, %v292
  %v444 = vsub.f32 %v35, %v292
  %v445 = vsub.f32 %v36, %v292
  %v446 = vsub.f32 %v37, %v292
  %v447 = vsub.f32 %v38, %v293
  %v448 = vsub.f32 %v39, %v293
  %v449 = vsub.f32 %v40, %v293
  %v450 = vsub.f32 %v41, %v293
  %v451 = vsub.f32 %v42, %v294
  %v452 = vsub.f32 %v43, %v294
  %v453 = vsub.f32 %v44, %v294
  %v454 = vsub.f32 %v45, %v294
  %v455 = vmul.f32 %v423, %v344
  %v456 = vmul.f32 %v424, %v344
  %v457 = vmul.f32 %v425, %v344
  %v458 = vmul.f32 %v426, %v344
  %v459 = vmul.f32 %v427, %v354
  %v460 = vmul.f32 %v428, %v354
  %v461 = vmul.f32 %v429, %v354
  %v462 = vmul.f32 %v430, %v354
  %v463 = vmul.f32 %v431, %v364
  %v464 = vmul.f32 %v432, %v364
  %v465 = vmul.f32 %v433, %v364
  %v466 = vmul.f32 %v434, %v364
  %v467 = vmul.f32 %v435, %v374
  %v468 = vmul.f32 %v436, %v374
  %v469 = vmul.f32 %v437, %v374
  %v470 = vmul.f32 %v438, %v374
  %v471 = vmul.f32 %v439, %v384
  %v472 = vmul.f32 %v440, %v384
  %v473 = vmul.f32 %v441, %v384
  %v474 = vmul.f32 %v442, %v384
  %v475 = vmul.f32 %v443, %v394
  %v476 = vmul.f32 %v444, %v394
  %v477 = vmul.f32 %v445, %v394
  %v478 = vmul.f32 %v446, %v394
  %v479 = vmul.f32 %v447, %v404
  %v480 = vmul.f32 %v448, %v404
  %v481 = vmul.f32 %v449, %v404
  %v482 = vmul.f32 %v450, %v404
  %v483 = vmul.f32 %v451, %v414
  %v484 = vmul.f32 %v452, %v414
  %v485 = vmul.f32 %v453, %v414
  %v486 = vmul.f32 %v454, %v414
  %488 = vset.pattern.permute.xlu0 0
  %489 = vperm.xlu0 %488, %v415
  %v490 = vpop.permute.xlu0 %489
  %493 = vset.pattern.permute.xlu0 0
  %494 = vperm.xlu0 %493, %v416
  %v495 = vpop.permute.xlu0 %494
  %498 = vset.pattern.permute.xlu0 0
  %499 = vperm.xlu0 %498, %v417
  %v500 = vpop.permute.xlu0 %499
  %503 = vset.pattern.permute.xlu0 0
  %504 = vperm.xlu0 %503, %v418
  %v505 = vpop.permute.xlu0 %504
  %v507 = vmul.f32 %v455, %v490
  %v508 = vmul.f32 %v456, %v495
  %v509 = vmul.f32 %v457, %v500
  %v510 = vmul.f32 %v458, %v505
  %v511 = vmul.f32 %v459, %v490
  %v512 = vmul.f32 %v460, %v495
  %v513 = vmul.f32 %v461, %v500
  %v514 = vmul.f32 %v462, %v505
  %v515 = vmul.f32 %v463, %v490
  %v516 = vmul.f32 %v464, %v495
  %v517 = vmul.f32 %v465, %v500
  %v518 = vmul.f32 %v466, %v505
  %v519 = vmul.f32 %v467, %v490
  %v520 = vmul.f32 %v468, %v495
  %v521 = vmul.f32 %v469, %v500
  %v522 = vmul.f32 %v470, %v505
  %v523 = vmul.f32 %v471, %v490
  %v524 = vmul.f32 %v472, %v495
  %v525 = vmul.f32 %v473, %v500
  %v526 = vmul.f32 %v474, %v505
  %v527 = vmul.f32 %v475, %v490
  %v528 = vmul.f32 %v476, %v495
  %v529 = vmul.f32 %v477, %v500
  %v530 = vmul.f32 %v478, %v505
  %v531 = vmul.f32 %v479, %v490
  %v532 = vmul.f32 %v480, %v495
  %v533 = vmul.f32 %v481, %v500
  %v534 = vmul.f32 %v482, %v505
  %v535 = vmul.f32 %v483, %v490
  %v536 = vmul.f32 %v484, %v495
  %v537 = vmul.f32 %v485, %v500
  %v538 = vmul.f32 %v486, %v505
  %540 = vset.pattern.permute.xlu0 0
  %541 = vperm.xlu0 %540, %v419
  %v542 = vpop.permute.xlu0 %541
  %545 = vset.pattern.permute.xlu0 0
  %546 = vperm.xlu0 %545, %v420
  %v547 = vpop.permute.xlu0 %546
  %550 = vset.pattern.permute.xlu0 0
  %551 = vperm.xlu0 %550, %v421
  %v552 = vpop.permute.xlu0 %551
  %555 = vset.pattern.permute.xlu0 0
  %556 = vperm.xlu0 %555, %v422
  %v557 = vpop.permute.xlu0 %556
  %v559 = vadd.f32 %v507, %v542
  %v560 = vadd.f32 %v508, %v547
  %v561 = vadd.f32 %v509, %v552
  %v562 = vadd.f32 %v510, %v557
  %v563 = vadd.f32 %v511, %v542
  %v564 = vadd.f32 %v512, %v547
  %v565 = vadd.f32 %v513, %v552
  %v566 = vadd.f32 %v514, %v557
  %v567 = vadd.f32 %v515, %v542
  %v568 = vadd.f32 %v516, %v547
  %v569 = vadd.f32 %v517, %v552
  %v570 = vadd.f32 %v518, %v557
  %v571 = vadd.f32 %v519, %v542
  %v572 = vadd.f32 %v520, %v547
  %v573 = vadd.f32 %v521, %v552
  %v574 = vadd.f32 %v522, %v557
  %v575 = vadd.f32 %v523, %v542
  %v576 = vadd.f32 %v524, %v547
  %v577 = vadd.f32 %v525, %v552
  %v578 = vadd.f32 %v526, %v557
  %v579 = vadd.f32 %v527, %v542
  %v580 = vadd.f32 %v528, %v547
  %v581 = vadd.f32 %v529, %v552
  %v582 = vadd.f32 %v530, %v557
  %v583 = vadd.f32 %v531, %v542
  %v584 = vadd.f32 %v532, %v547
  %v585 = vadd.f32 %v533, %v552
  %v586 = vadd.f32 %v534, %v557
  %v587 = vadd.f32 %v535, %v542
  %v588 = vadd.f32 %v536, %v547
  %v589 = vadd.f32 %v537, %v552
  %v590 = vadd.f32 %v538, %v557
  %591 = vst.msk [vmem:[%s3] sm:$0xff] %vm46, %v559
  %592 = vst.msk [vmem:[%s3 + $0x8] sm:$0xff] %vm46, %v560
  %593 = vst.msk [vmem:[%s3 + $0x10] sm:$0xff] %vm46, %v561
  %594 = vst.msk [vmem:[%s3 + $0x18] sm:$0xff] %vm46, %v562
  %595 = vst.msk [vmem:[%s3 + $0x20] sm:$0xff] %vm46, %v563
  %596 = vst.msk [vmem:[%s3 + $0x28] sm:$0xff] %vm46, %v564
  %597 = vst.msk [vmem:[%s3 + $0x30] sm:$0xff] %vm46, %v565
  %598 = vst.msk [vmem:[%s3 + $0x38] sm:$0xff] %vm46, %v566
  %599 = vst.msk [vmem:[%s3 + $0x40] sm:$0xff] %vm46, %v567
  %600 = vst.msk [vmem:[%s3 + $0x48] sm:$0xff] %vm46, %v568
  %601 = vst.msk [vmem:[%s3 + $0x50] sm:$0xff] %vm46, %v569
  %602 = vst.msk [vmem:[%s3 + $0x58] sm:$0xff] %vm46, %v570
  %603 = vst.msk [vmem:[%s3 + $0x60] sm:$0xff] %vm46, %v571
  %604 = vst.msk [vmem:[%s3 + $0x68] sm:$0xff] %vm46, %v572
  %605 = vst.msk [vmem:[%s3 + $0x70] sm:$0xff] %vm46, %v573
  %606 = vst.msk [vmem:[%s3 + $0x78] sm:$0xff] %vm46, %v574
  %607 = vst.msk [vmem:[%s3 + $0x80] sm:$0xff] %vm46, %v575
  %608 = vst.msk [vmem:[%s3 + $0x88] sm:$0xff] %vm46, %v576
  %609 = vst.msk [vmem:[%s3 + $0x90] sm:$0xff] %vm46, %v577
  %610 = vst.msk [vmem:[%s3 + $0x98] sm:$0xff] %vm46, %v578
  %611 = vst.msk [vmem:[%s3 + $0xa0] sm:$0xff] %vm46, %v579
  %612 = vst.msk [vmem:[%s3 + $0xa8] sm:$0xff] %vm46, %v580
  %613 = vst.msk [vmem:[%s3 + $0xb0] sm:$0xff] %vm46, %v581
  %614 = vst.msk [vmem:[%s3 + $0xb8] sm:$0xff] %vm46, %v582
  %615 = vst.msk [vmem:[%s3 + $0xc0] sm:$0xff] %vm46, %v583
  %616 = vst.msk [vmem:[%s3 + $0xc8] sm:$0xff] %vm46, %v584
  %617 = vst.msk [vmem:[%s3 + $0xd0] sm:$0xff] %vm46, %v585
  %618 = vst.msk [vmem:[%s3 + $0xd8] sm:$0xff] %vm46, %v586
  %619 = vst.msk [vmem:[%s3 + $0xe0] sm:$0xff] %vm46, %v587
  %620 = vst.msk [vmem:[%s3 + $0xe8] sm:$0xff] %vm46, %v588
  %621 = vst.msk [vmem:[%s3 + $0xf0] sm:$0xff] %vm46, %v589
  %622 = vst.msk [vmem:[%s3 + $0xf8] sm:$0xff] %vm46, %v590
  // Predicated region
  $region14: #{tpu_custom_call.1} parent=0 // pred_check
    _
  $region15: #{tpu_custom_call.1} parent=0 // pred_check_branch
    %624 = sbr.rel (0) target = $region17
  $region16: #{tpu_custom_call.1} parent=0 // pred_region
    _
  $region17: #{tpu_custom_call.1} parent=0 // pred_fallthru
    _
  // Predicated region
  $region18: #{tpu_custom_call.1} parent=0 // pred_check
    _
  $region19: #{tpu_custom_call.1} parent=0 // pred_check_branch
    %626 = sbr.rel (0) target = $region21
  $region20: #{tpu_custom_call.1} parent=0 // pred_region
    _
  $region21: #{tpu_custom_call.1} parent=0 // pred_fallthru
    _

</llo_original>
